<compile_context>
chip_gen: v7x
topology: tpu7x:2x2x1
jax: 0.10.0
libtpu: 0.0.40
codegen_flags: <defaults>
</compile_context>

<pallas_src>
import jax
import jax.numpy as jnp
from jax.experimental import pallas as pl
from jax.experimental.pallas import tpu as pltpu

KSIZE = 64
STRIDE = 32
PAD = 16
CH = 512

OUT_W = 256                 # output samples per kernel row (2 lane widths, full MXU N on v6e/v7x)
WIN_W = OUT_W + 128         # 384-sample input window per row (1.5x duplication)
TILE_R_MAX = 4096           # rows per grid step (~14 MiB double-buffered: fits v5e/v6e/v7x)


def _round_up(a, m):
    return ((a + m - 1) // m) * m


def basecnn_kernel(win_ref, w_ref, b_ref, out_ref):
    # (tile_r, 384) bf16 @ (384, 256) bf16 -> f32 accumulate, bias add in f32.
    out_ref[...] = (
        jnp.dot(win_ref[...], w_ref[...], preferred_element_type=jnp.float32)
        + b_ref[...]
    )


def _fused_weights(conv_w, conv_b, deconv_w, deconv_b):
    """Collapse conv -> deconv (+ overlap-add + crop) into a (384,256) weight and a bias row."""
    hi = jax.lax.Precision.HIGHEST
    w = conv_w[:, 0, :].T.astype(jnp.float32)                          # (64, 512)
    wd = deconv_w[:, 0, :].astype(jnp.float32)                         # (512, 64)
    wf = jnp.dot(w, wd, precision=hi)                                  # (64, 64) fused conv*deconv
    b_contrib = jnp.dot(conv_b.astype(jnp.float32), wd, precision=hi)  # (64,)

    # A conv frame at relative position d (d = -1..8 w.r.t. a 256-sample output row)
    # occupies window samples [32*(d+1), 32*(d+1)+64) and contributes to output
    # columns u with deconv tap o = u - 32*d + 16 in [0, 64).
    wwin = jnp.zeros((WIN_W, OUT_W), jnp.float32)
    for d in range(-1, OUT_W // STRIDE + 1):
        q0 = STRIDE * (d + 1)
        u_lo = max(0, STRIDE * d - PAD)
        u_hi = min(OUT_W, STRIDE * d + KSIZE - PAD)
        if u_lo >= u_hi:
            continue
        o_lo = u_lo - STRIDE * d + PAD
        o_hi = u_hi - STRIDE * d + PAD
        wwin = wwin.at[q0:q0 + KSIZE, u_lo:u_hi].add(wf[:, o_lo:o_hi])

    # Interior bias: every output sample receives exactly two frame biases + deconv bias.
    v = (jnp.arange(OUT_W) + PAD) % STRIDE
    b_row = b_contrib[v] + b_contrib[v + STRIDE] + deconv_b[0]         # (256,)
    return wf, b_contrib, wwin, b_row


@jax.jit
def basecnn_forward(x, conv_w, conv_b, deconv_w, deconv_b):
    """x: (B, 1, T) float32 with T % 32 == 0.  Returns (B, 1, T) float32."""
    B, _, T = x.shape
    assert T % STRIDE == 0 and T >= STRIDE, "BaseCNN Pallas kernel assumes T % 32 == 0"

    wf, b_contrib, wwin, b_row = _fused_weights(conv_w, conv_b, deconv_w, deconv_b)

    # --- glue: lane-dense overlapping windows, all in bf16 (reshape + concat, no gather) ---
    R = pl.cdiv(T, OUT_W)                     # 256-sample output rows per batch
    xw_len = OUT_W * (R + 1)
    x_bf = x[:, 0, :].astype(jnp.bfloat16)    # cast BEFORE padding: all glue traffic is bf16
    xw = jnp.pad(x_bf, ((0, 0), (PAD + STRIDE, xw_len - (PAD + STRIDE) - T)))
    xa = xw[:, :OUT_W * R].reshape(B, R, OUT_W)                      # window[:, :256]
    xb = xw[:, OUT_W:].reshape(B, R, OUT_W)[:, :, :WIN_W - OUT_W]    # window[:, 256:384]
    windows = jnp.concatenate([xa, xb], axis=2).reshape(B * R, WIN_W)

    # --- tiling: big row tiles, minimal padding, grid >= 2 on large inputs (v7x megacore) ---
    nr = B * R
    nsteps = pl.cdiv(nr, TILE_R_MAX)
    if nsteps == 1 and nr >= 2048:
        nsteps = 2
    tile_r = _round_up(pl.cdiv(nr, nsteps), 8)
    nr_p = tile_r * nsteps
    if nr_p > nr:
        windows = jnp.pad(windows, ((0, nr_p - nr), (0, 0)))

    # --- Pallas: one streaming matmul, tiled & double-buffered over rows ---
    out_rows = pl.pallas_call(
        basecnn_kernel,
        out_shape=jax.ShapeDtypeStruct((nr_p, OUT_W), jnp.float32),
        grid=(nsteps,),
        in_specs=[
            pl.BlockSpec((tile_r, WIN_W), lambda i: (i, 0)),     # windows tile
            pl.BlockSpec((WIN_W, OUT_W), lambda i: (0, 0)),      # fused weight (resident)
            pl.BlockSpec((1, OUT_W), lambda i: (0, 0)),          # bias row (resident)
        ],
        out_specs=pl.BlockSpec((tile_r, OUT_W), lambda i: (i, 0)),
        compiler_params=pltpu.CompilerParams(
            dimension_semantics=("parallel",),
            vmem_limit_bytes=32 * 1024 * 1024,
        ),
        cost_estimate=pl.CostEstimate(
            flops=2 * nr_p * WIN_W * OUT_W,
            transcendentals=0,
            bytes_accessed=nr_p * WIN_W * 2 + nr_p * OUT_W * 4
                           + WIN_W * OUT_W * 2 + OUT_W * 4,
        ),
    )(windows, wwin.astype(jnp.bfloat16), b_row.reshape(1, OUT_W))

    # --- unpack (skip trivial slices) ---
    if nr_p > nr:
        out_rows = out_rows[:nr]
    out = out_rows.reshape(B, R * OUT_W)
    if R * OUT_W > T:
        out = out[:, :T]

    # --- edge corrections: remove phantom frames -1 and L (16 samples each end),
    #     as tiny in-place updates (no full-output concat / re-write) ---
    x_left = x[:, 0, :PAD].astype(jnp.float32)
    x_right = x[:, 0, T - PAD:].astype(jnp.float32)
    left_fix = jnp.dot(x_left, wf[KSIZE - PAD:, KSIZE - PAD:]) + b_contrib[KSIZE - PAD:]
    right_fix = jnp.dot(x_right, wf[:PAD, :PAD]) + b_contrib[:PAD]
    out = out.at[:, :PAD].add(-left_fix)
    out = out.at[:, T - PAD:].add(-right_fix)
    return out[:, None, :]                                       # (B, 1, T)


def reference_forward(x, conv_w, conv_b, deconv_w, deconv_b):
    """Straightforward f32 im2col + overlap-add reference (mirrors PyTorch semantics)."""
    B, _, T = x.shape
    L = (T + 2 * PAD - KSIZE) // STRIDE + 1
    x_pad = jnp.pad(x[:, 0, :], ((0, 0), (PAD, PAD)))
    idx = jnp.arange(L)[:, None] * STRIDE + jnp.arange(KSIZE)[None, :]
    frames = x_pad[:, idx]                                       # (B, L, 64)
    hi = jax.lax.Precision.HIGHEST
    ft = jnp.einsum('blk,ck->blc', frames, conv_w[:, 0, :], precision=hi) + conv_b
    contrib = jnp.einsum('blc,ck->blk', ft, deconv_w[:, 0, :], precision=hi)
    out_pad = jnp.zeros((B, L + 1, STRIDE), jnp.float32)
    out_pad = out_pad.at[:, :L, :].add(contrib[:, :, :STRIDE])
    out_pad = out_pad.at[:, 1:, :].add(contrib[:, :, STRIDE:])
    out_full = out_pad.reshape(B, (L + 1) * STRIDE)
    out = out_full[:, PAD:PAD + L * STRIDE] + deconv_b[0]
    return out[:, None, :]


if __name__ == "__main__":
    key = jax.random.PRNGKey(0)
    k_x, k_w, k_b, k_wd, k_bd = jax.random.split(key, 5)

    # deterministic synthetic parameters (shapes match nn.Conv1d / nn.ConvTranspose1d)
    conv_w = 0.05 * jax.random.normal(k_w, (CH, 1, KSIZE), dtype=jnp.float32)
    conv_b = 0.05 * jax.random.normal(k_b, (CH,), dtype=jnp.float32)
    deconv_w = 0.05 * jax.random.normal(k_wd, (CH, 1, KSIZE), dtype=jnp.float32)
    deconv_b = 0.05 * jax.random.normal(k_bd, (1,), dtype=jnp.float32)

    # small shapes; T multiple of 32 -> output length == T.  Second case exercises
    # the non-multiple-of-256 crop path.
    for (B, T) in [(2, 512), (2, 160)]:
        x = jax.random.normal(jax.random.fold_in(k_x, T), (B, 1, T), dtype=jnp.float32)
        out = basecnn_forward(x, conv_w, conv_b, deconv_w, deconv_b)
        jax.block_until_ready(out)
        assert out.shape == (B, 1, T), out.shape

        # numerical check vs f32 reference (bf16 streaming -> loose tolerance)
        ref = reference_forward(x, conv_w, conv_b, deconv_w, deconv_b)
        err = float(jnp.max(jnp.abs(out - ref)))
        assert err < 1e-1, f"T={T}: max abs error vs reference: {err}"

    print("KERNEL_OK")
</pallas_src>

<mosaic_0001>
module attributes {stable_mosaic.version = 11 : i64} {
  func.func @basecnn_kernel(%arg0: i32, %arg1: memref<8x384xbf16, #tpu.memory_space<vmem>>, %arg2: memref<384x256xbf16, #tpu.memory_space<vmem>>, %arg3: memref<1x256xf32, #tpu.memory_space<vmem>>, %arg4: memref<8x256xf32, #tpu.memory_space<vmem>>) attributes {dimension_semantics = [#tpu.dimension_semantics<parallel>], iteration_bounds = array<i64: 1>, scalar_prefetch = 0 : i64, scratch_operands = 0 : i64, tpu.core_type = #tpu.core_type<tc>, window_params = [{transform_indices = @transform_0, window_bounds = array<i64: 8, 384>}, {pipeline_mode = #tpu.pipeline_mode<synchronous>, transform_indices = @transform_1, window_bounds = array<i64: 384, 256>}, {pipeline_mode = #tpu.pipeline_mode<synchronous>, transform_indices = @transform_2, window_bounds = array<i64: 1, 256>}, {transform_indices = @transform_3, window_bounds = array<i64: 8, 256>}]} {
    %c0 = arith.constant 0 : index
    %c0_0 = arith.constant 0 : index
    %0 = vector.load %arg1[%c0, %c0_0] : memref<8x384xbf16, #tpu.memory_space<vmem>>, vector<8x384xbf16>
    %c0_1 = arith.constant 0 : index
    %c0_2 = arith.constant 0 : index
    %1 = vector.load %arg2[%c0_1, %c0_2] : memref<384x256xbf16, #tpu.memory_space<vmem>>, vector<384x256xbf16>
    %cst = arith.constant dense<0.000000e+00> : vector<8x256xf32>
    %2 = tpu.matmul %0, %1, %cst {dimension_numbers = #tpu.dot_dimension_numbers<[1], [0], [0], [1], [0, 0, 1, 1], [], []>} : vector<8x384xbf16>, vector<384x256xbf16>, vector<8x256xf32> -> vector<8x256xf32>
    %c0_3 = arith.constant 0 : index
    %c0_4 = arith.constant 0 : index
    %3 = vector.load %arg3[%c0_3, %c0_4] : memref<1x256xf32, #tpu.memory_space<vmem>>, vector<1x256xf32>
    %4 = vector.broadcast %3 : vector<1x256xf32> to vector<8x256xf32>
    %5 = arith.addf %2, %4 : vector<8x256xf32>
    %c0_5 = arith.constant 0 : index
    %c0_6 = arith.constant 0 : index
    %6 = vector.load %arg4[%c0_5, %c0_6] : memref<8x256xf32, #tpu.memory_space<vmem>>, vector<8x256xf32>
    tpu.vector_store %arg4[%c0_5, %c0_6], %5 {strides = array<i32>} : memref<8x256xf32, #tpu.memory_space<vmem>>, vector<8x256xf32>,
    return
  }
  func.func @transform_0(%arg0: i32) -> (i32, i32) {
    %c0_i32 = arith.constant 0 : i32
    %c0_i32_0 = arith.constant 0 : i32
    return %arg0, %c0_i32 : i32, i32
  }
  func.func @transform_1(%arg0: i32) -> (i32, i32) {
    %c0_i32 = arith.constant 0 : i32
    %c0_i32_0 = arith.constant 0 : i32
    %c0_i32_1 = arith.constant 0 : i32
    return %c0_i32, %c0_i32_0 : i32, i32
  }
  func.func @transform_2(%arg0: i32) -> (i32, i32) {
    %c0_i32 = arith.constant 0 : i32
    %c0_i32_0 = arith.constant 0 : i32
    %c0_i32_1 = arith.constant 0 : i32
    return %c0_i32, %c0_i32_0 : i32, i32
  }
  func.func @transform_3(%arg0: i32) -> (i32, i32) {
    %c0_i32 = arith.constant 0 : i32
    %c0_i32_0 = arith.constant 0 : i32
    return %arg0, %c0_i32 : i32, i32
  }
}

</mosaic_0001>

<llo_original>
// kernel: basecnn_forward.1
$region0: #{basecnn_forward.1}
  #allocation0 [shape = 'u32[]', space=smem, size = 0x4, offset = 0x4, fixed_abs, tag = 'smem constant byte address 0x4 - core index']
  #allocation1 [shape = 'u32[144,128]{1,0:T(1,128)}', space=vmem, size = 0x12000, scoped, tag = 'internal scratch']
  %s0 = inlined_call_operand.vmem [shape: bf16[8,384], index: 0, kind: input, shape index: {}]
  %s1 = inlined_call_operand.vmem [shape: bf16[384,256], index: 1, kind: input, shape index: {}]
  %s2 = inlined_call_operand.vmem [shape: f32[1,256], index: 2, kind: input, shape index: {}]
  %s3 = inlined_call_operand.vmem [shape: f32[8,256], index: 3, kind: output, shape index: {}]
  %s4 = sld [smem:[#allocation0]]
  $region22: #{basecnn_forward.1} parent=0
    _
  %s6 = ssub.s32 1, %s4
  %s7 = scalar_select 0, %s6, %s4
  // Predicated region
  $region2: #{basecnn_forward.1} parent=0 // pred_check
    _
  $region3: #{basecnn_forward.1} parent=0 // pred_check_branch
    %9 = sbr.rel (0) target = $region5
  $region4: #{basecnn_forward.1} parent=0 // pred_region
    _
  $region5: #{basecnn_forward.1} parent=0 // pred_fallthru
    _
  // Predicated region
  $region6: #{basecnn_forward.1} parent=0 // pred_check
    _
  $region7: #{basecnn_forward.1} parent=0 // pred_check_branch
    %11 = sbr.rel (0) target = $region9
  $region8: #{basecnn_forward.1} parent=0 // pred_region
    _
  $region9: #{basecnn_forward.1} parent=0 // pred_fallthru
    _
  // Predicated region
  $region10: #{basecnn_forward.1} parent=0 // pred_check
    _
  $region11: #{basecnn_forward.1} parent=0 // pred_check_branch
    %13 = sbr.rel (0) target = $region13
  $region12: #{basecnn_forward.1} parent=0 // pred_region
    _
  $region13: #{basecnn_forward.1} parent=0 // pred_fallthru
    _
  %v15 = vld [vmem:[%s0] sm:$0xff]
  %v16 = vld [vmem:[%s0 + $0x8] sm:$0xf]
  %v17 = vld [vmem:[%s1] sm:$0xff]
  %v18 = vld [vmem:[%s1 + $0x8] sm:$0xff]
  %v19 = vld [vmem:[%s1 + $0x10] sm:$0xff]
  %v20 = vld [vmem:[%s1 + $0x18] sm:$0xff]
  %v21 = vld [vmem:[%s1 + $0x20] sm:$0xff]
  %v22 = vld [vmem:[%s1 + $0x28] sm:$0xff]
  %v23 = vld [vmem:[%s1 + $0x30] sm:$0xff]
  %v24 = vld [vmem:[%s1 + $0x38] sm:$0xff]
  %v25 = vld [vmem:[%s1 + $0x40] sm:$0xff]
  %v26 = vld [vmem:[%s1 + $0x48] sm:$0xff]
  %v27 = vld [vmem:[%s1 + $0x50] sm:$0xff]
  %v28 = vld [vmem:[%s1 + $0x58] sm:$0xff]
  %v29 = vld [vmem:[%s1 + $0x60] sm:$0xff]
  %v30 = vld [vmem:[%s1 + $0x68] sm:$0xff]
  %v31 = vld [vmem:[%s1 + $0x70] sm:$0xff]
  %v32 = vld [vmem:[%s1 + $0x78] sm:$0xff]
  %v33 = vld [vmem:[%s1 + $0x80] sm:$0xff]
  %v34 = vld [vmem:[%s1 + $0x88] sm:$0xff]
  %v35 = vld [vmem:[%s1 + $0x90] sm:$0xff]
  %v36 = vld [vmem:[%s1 + $0x98] sm:$0xff]
  %v37 = vld [vmem:[%s1 + $0xa0] sm:$0xff]
  %v38 = vld [vmem:[%s1 + $0xa8] sm:$0xff]
  %v39 = vld [vmem:[%s1 + $0xb0] sm:$0xff]
  %v40 = vld [vmem:[%s1 + $0xb8] sm:$0xff]
  %v41 = vld [vmem:[%s1 + $0xc0] sm:$0xff]
  %v42 = vld [vmem:[%s1 + $0xc8] sm:$0xff]
  %v43 = vld [vmem:[%s1 + $0xd0] sm:$0xff]
  %v44 = vld [vmem:[%s1 + $0xd8] sm:$0xff]
  %v45 = vld [vmem:[%s1 + $0xe0] sm:$0xff]
  %v46 = vld [vmem:[%s1 + $0xe8] sm:$0xff]
  %v47 = vld [vmem:[%s1 + $0xf0] sm:$0xff]
  %v48 = vld [vmem:[%s1 + $0xf8] sm:$0xff]
  %v49 = vld [vmem:[%s1 + $0x100] sm:$0xff]
  %v50 = vld [vmem:[%s1 + $0x108] sm:$0xff]
  %v51 = vld [vmem:[%s1 + $0x110] sm:$0xff]
  %v52 = vld [vmem:[%s1 + $0x118] sm:$0xff]
  %v53 = vld [vmem:[%s1 + $0x120] sm:$0xff]
  %v54 = vld [vmem:[%s1 + $0x128] sm:$0xff]
  %v55 = vld [vmem:[%s1 + $0x130] sm:$0xff]
  %v56 = vld [vmem:[%s1 + $0x138] sm:$0xff]
  %v57 = vld [vmem:[%s1 + $0x140] sm:$0xff]
  %v58 = vld [vmem:[%s1 + $0x148] sm:$0xff]
  %v59 = vld [vmem:[%s1 + $0x150] sm:$0xff]
  %v60 = vld [vmem:[%s1 + $0x158] sm:$0xff]
  %v61 = vld [vmem:[%s1 + $0x160] sm:$0xff]
  %v62 = vld [vmem:[%s1 + $0x168] sm:$0xff]
  %v63 = vld [vmem:[%s1 + $0x170] sm:$0xff]
  %v64 = vld [vmem:[%s1 + $0x178] sm:$0xff]
  %v65 = vld [vmem:[%s2] sm:$0x3]
  %v67 = vlaneseq
  %v68 = vshrl.u32 %v67, 7
  %v69 = vsub.s32 0, %v68
  %v70 = vrot.slane %v65, %v69
  %v71 = vlaneseq
  %v72 = vshrl.u32 %v71, 7
  %v73 = vsub.s32 1, %v72
  %v74 = vrot.slane %v65, %v73
  %v79 = vunpack.c.l.b16 %v15
  %v80 = vunpack.c.h.b16 %v15
  %v81 = vunpack.c.l.b16 %v16
  %v82 = vpack.c.b16 %v79, %v79
  %v83 = vpack.c.b16 %v80, %v80
  %v84 = vpack.c.b16 %v81, %v81
  %v136 = vunpack.c.l.b16 %v17
  %v137 = vunpack.c.h.b16 %v17
  %v138 = vunpack.c.l.b16 %v18
  %v139 = vunpack.c.h.b16 %v18
  %v140 = vunpack.c.l.b16 %v19
  %v141 = vunpack.c.h.b16 %v19
  %v142 = vunpack.c.l.b16 %v20
  %v143 = vunpack.c.h.b16 %v20
  %v144 = vunpack.c.l.b16 %v21
  %v145 = vunpack.c.h.b16 %v21
  %v146 = vunpack.c.l.b16 %v22
  %v147 = vunpack.c.h.b16 %v22
  %v148 = vunpack.c.l.b16 %v23
  %v149 = vunpack.c.h.b16 %v23
  %v150 = vunpack.c.l.b16 %v24
  %v151 = vunpack.c.h.b16 %v24
  %v152 = vunpack.c.l.b16 %v25
  %v153 = vunpack.c.h.b16 %v25
  %v154 = vunpack.c.l.b16 %v26
  %v155 = vunpack.c.h.b16 %v26
  %v156 = vunpack.c.l.b16 %v27
  %v157 = vunpack.c.h.b16 %v27
  %v158 = vunpack.c.l.b16 %v28
  %v159 = vunpack.c.h.b16 %v28
  %v160 = vunpack.c.l.b16 %v29
  %v161 = vunpack.c.h.b16 %v29
  %v162 = vunpack.c.l.b16 %v30
  %v163 = vunpack.c.h.b16 %v30
  %v164 = vunpack.c.l.b16 %v31
  %v165 = vunpack.c.h.b16 %v31
  %v166 = vunpack.c.l.b16 %v32
  %v167 = vunpack.c.h.b16 %v32
  %v168 = vunpack.c.l.b16 %v33
  %v169 = vunpack.c.h.b16 %v33
  %v170 = vunpack.c.l.b16 %v34
  %v171 = vunpack.c.h.b16 %v34
  %v172 = vunpack.c.l.b16 %v35
  %v173 = vunpack.c.h.b16 %v35
  %v174 = vunpack.c.l.b16 %v36
  %v175 = vunpack.c.h.b16 %v36
  %v176 = vunpack.c.l.b16 %v37
  %v177 = vunpack.c.h.b16 %v37
  %v178 = vunpack.c.l.b16 %v38
  %v179 = vunpack.c.h.b16 %v38
  %v180 = vunpack.c.l.b16 %v39
  %v181 = vunpack.c.h.b16 %v39
  %v182 = vunpack.c.l.b16 %v40
  %v183 = vunpack.c.h.b16 %v40
  %v184 = vunpack.c.l.b16 %v41
  %v185 = vunpack.c.h.b16 %v41
  %v186 = vunpack.c.l.b16 %v42
  %v187 = vunpack.c.h.b16 %v42
  %v188 = vunpack.c.l.b16 %v43
  %v189 = vunpack.c.h.b16 %v43
  %v190 = vunpack.c.l.b16 %v44
  %v191 = vunpack.c.h.b16 %v44
  %v192 = vunpack.c.l.b16 %v45
  %v193 = vunpack.c.h.b16 %v45
  %v194 = vunpack.c.l.b16 %v46
  %v195 = vunpack.c.h.b16 %v46
  %v196 = vunpack.c.l.b16 %v47
  %v197 = vunpack.c.h.b16 %v47
  %v198 = vunpack.c.l.b16 %v48
  %v199 = vunpack.c.h.b16 %v48
  %v200 = vunpack.c.l.b16 %v49
  %v201 = vunpack.c.h.b16 %v49
  %v202 = vunpack.c.l.b16 %v50
  %v203 = vunpack.c.h.b16 %v50
  %v204 = vunpack.c.l.b16 %v51
  %v205 = vunpack.c.h.b16 %v51
  %v206 = vunpack.c.l.b16 %v52
  %v207 = vunpack.c.h.b16 %v52
  %v208 = vunpack.c.l.b16 %v53
  %v209 = vunpack.c.h.b16 %v53
  %v210 = vunpack.c.l.b16 %v54
  %v211 = vunpack.c.h.b16 %v54
  %v212 = vunpack.c.l.b16 %v55
  %v213 = vunpack.c.h.b16 %v55
  %v214 = vunpack.c.l.b16 %v56
  %v215 = vunpack.c.h.b16 %v56
  %v216 = vunpack.c.l.b16 %v57
  %v217 = vunpack.c.h.b16 %v57
  %v218 = vunpack.c.l.b16 %v58
  %v219 = vunpack.c.h.b16 %v58
  %v220 = vunpack.c.l.b16 %v59
  %v221 = vunpack.c.h.b16 %v59
  %v222 = vunpack.c.l.b16 %v60
  %v223 = vunpack.c.h.b16 %v60
  %v224 = vunpack.c.l.b16 %v61
  %v225 = vunpack.c.h.b16 %v61
  %v226 = vunpack.c.l.b16 %v62
  %v227 = vunpack.c.h.b16 %v62
  %v228 = vunpack.c.l.b16 %v63
  %v229 = vunpack.c.h.b16 %v63
  %v230 = vunpack.c.l.b16 %v64
  %v231 = vunpack.c.h.b16 %v64
  %v232 = vpack.c.b16 %v138, %v136
  %v233 = vpack.c.b16 %v139, %v137
  %v234 = vpack.c.b16 %v142, %v140
  %v235 = vpack.c.b16 %v143, %v141
  %v236 = vpack.c.b16 %v146, %v144
  %v237 = vpack.c.b16 %v147, %v145
  %v238 = vpack.c.b16 %v150, %v148
  %v239 = vpack.c.b16 %v151, %v149
  %v240 = vpack.c.b16 %v154, %v152
  %v241 = vpack.c.b16 %v155, %v153
  %v242 = vpack.c.b16 %v158, %v156
  %v243 = vpack.c.b16 %v159, %v157
  %v244 = vpack.c.b16 %v162, %v160
  %v245 = vpack.c.b16 %v163, %v161
  %v246 = vpack.c.b16 %v166, %v164
  %v247 = vpack.c.b16 %v167, %v165
  %v248 = vpack.c.b16 %v170, %v168
  %v249 = vpack.c.b16 %v171, %v169
  %v250 = vpack.c.b16 %v174, %v172
  %v251 = vpack.c.b16 %v175, %v173
  %v252 = vpack.c.b16 %v178, %v176
  %v253 = vpack.c.b16 %v179, %v177
  %v254 = vpack.c.b16 %v182, %v180
  %v255 = vpack.c.b16 %v183, %v181
  %v256 = vpack.c.b16 %v186, %v184
  %v257 = vpack.c.b16 %v187, %v185
  %v258 = vpack.c.b16 %v190, %v188
  %v259 = vpack.c.b16 %v191, %v189
  %v260 = vpack.c.b16 %v194, %v192
  %v261 = vpack.c.b16 %v195, %v193
  %v262 = vpack.c.b16 %v198, %v196
  %v263 = vpack.c.b16 %v199, %v197
  %v264 = vpack.c.b16 %v202, %v200
  %v265 = vpack.c.b16 %v203, %v201
  %v266 = vpack.c.b16 %v206, %v204
  %v267 = vpack.c.b16 %v207, %v205
  %v268 = vpack.c.b16 %v210, %v208
  %v269 = vpack.c.b16 %v211, %v209
  %v270 = vpack.c.b16 %v214, %v212
  %v271 = vpack.c.b16 %v215, %v213
  %v272 = vpack.c.b16 %v218, %v216
  %v273 = vpack.c.b16 %v219, %v217
  %v274 = vpack.c.b16 %v222, %v220
  %v275 = vpack.c.b16 %v223, %v221
  %v276 = vpack.c.b16 %v226, %v224
  %v277 = vpack.c.b16 %v227, %v225
  %v278 = vpack.c.b16 %v230, %v228
  %v279 = vpack.c.b16 %v231, %v229
  %328 = vmatprep.subr.bf16.mxu0 %v233
  %329 = vmatpush1.bf16.msra.mxu0 %v232
  %330 = vmatprep.subr.bf16.mxu0 %v235
  %331 = vmatpush1.bf16.msra.mxu0 %v234
  %332 = vmatprep.subr.bf16.mxu0 %v237
  %333 = vmatpush1.bf16.msra.mxu0 %v236
  %334 = vmatprep.subr.bf16.mxu0 %v239
  %335 = vmatpush1.bf16.msra.mxu0 %v238
  %336 = vmatprep.subr.bf16.mxu0 %v241
  %337 = vmatpush1.bf16.msra.mxu0 %v240
  %338 = vmatprep.subr.bf16.mxu0 %v243
  %339 = vmatpush1.bf16.msra.mxu0 %v242
  %340 = vmatprep.subr.bf16.mxu0 %v245
  %341 = vmatpush1.bf16.msra.mxu0 %v244
  %342 = vmatprep.subr.bf16.mxu0 %v247
  %343 = vmatpush1.bf16.msra.mxu0 %v246
  %344 = vmatprep.subr.bf16.mxu0 %v249
  %345 = vmatpush1.bf16.msra.mxu0 %v248
  %346 = vmatprep.subr.bf16.mxu0 %v251
  %347 = vmatpush1.bf16.msra.mxu0 %v250
  %348 = vmatprep.subr.bf16.mxu0 %v253
  %349 = vmatpush1.bf16.msra.mxu0 %v252
  %350 = vmatprep.subr.bf16.mxu0 %v255
  %351 = vmatpush1.bf16.msra.mxu0 %v254
  %352 = vmatprep.subr.bf16.mxu0 %v257
  %353 = vmatpush1.bf16.msra.mxu0 %v256
  %354 = vmatprep.subr.bf16.mxu0 %v259
  %355 = vmatpush1.bf16.msra.mxu0 %v258
  %356 = vmatprep.subr.bf16.mxu0 %v261
  %357 = vmatpush1.bf16.msra.mxu0 %v260
  %358 = vmatprep.subr.bf16.mxu0 %v263
  %359 = vmatpush1.bf16.msra.mxu0 %v262
  %360 = vmatprep.mubr.bf16.mxu0 %v83
  %361 = vmatmul.mubr.bf16.gmra.mrb[0].mxu0 %v82
  %v362 = vpop.f32.mrb[0].mxu0
  %v363 = vadd.f32 %v70, %v362
  %v364 = vpop.f32.mrb[0].mxu0
  %v365 = vadd.f32 %v74, %v364
  %v366 = vpop.f32.mrb[0].mxu0
  %v367 = vpop.f32.mrb[0].mxu0
  %368 = vdwg.mxu0
  %369 = vmatprep.subr.bf16.mxu0 %v265
  %370 = vmatpush1.bf16.msra.mxu0 %v264
  %371 = vmatprep.subr.bf16.mxu0 %v267
  %372 = vmatpush1.bf16.msra.mxu0 %v266
  %373 = vmatprep.subr.bf16.mxu0 %v269
  %374 = vmatpush1.bf16.msra.mxu0 %v268
  %375 = vmatprep.subr.bf16.mxu0 %v271
  %376 = vmatpush1.bf16.msra.mxu0 %v270
  %377 = vmatprep.subr.bf16.mxu0 %v273
  %378 = vmatpush1.bf16.msra.mxu0 %v272
  %379 = vmatprep.subr.bf16.mxu0 %v275
  %380 = vmatpush1.bf16.msra.mxu0 %v274
  %381 = vmatprep.subr.bf16.mxu0 %v277
  %382 = vmatpush1.bf16.msra.mxu0 %v276
  %383 = vmatprep.subr.bf16.mxu0 %v279
  %384 = vmatpush1.bf16.msra.mxu0 %v278
  %385 = vmatprep.subr.bf16.mxu0 0
  %386 = vmatpush1.bf16.msra.mxu0 0
  %387 = vmatprep.subr.bf16.mxu0 0
  %388 = vmatpush1.bf16.msra.mxu0 0
  %389 = vmatprep.subr.bf16.mxu0 0
  %390 = vmatpush1.bf16.msra.mxu0 0
  %391 = vmatprep.subr.bf16.mxu0 0
  %392 = vmatpush1.bf16.msra.mxu0 0
  %393 = vmatprep.subr.bf16.mxu0 0
  %394 = vmatpush1.bf16.msra.mxu0 0
  %395 = vmatprep.subr.bf16.mxu0 0
  %396 = vmatpush1.bf16.msra.mxu0 0
  %397 = vmatprep.subr.bf16.mxu0 0
  %398 = vmatpush1.bf16.msra.mxu0 0
  %399 = vmatprep.subr.bf16.mxu0 0
  %400 = vmatpush1.bf16.msra.mxu0 0
  %401 = vmatprep.mubr.bf16.mxu0 0
  %402 = vmatmul.mubr.bf16.gmra.mrb[0].mxu0 %v84
  %v403 = vpop.f32.mrb[0].mxu0
  %v404 = vadd.f32 %v363, %v403
  %v405 = vpop.f32.mrb[0].mxu0
  %v406 = vadd.f32 %v365, %v405
  %v407 = vpop.f32.mrb[0].mxu0
  %v408 = vpop.f32.mrb[0].mxu0
  %409 = vdwg.mxu0
  %410 = vst [vmem:[%s3] sm:$0xff] %v404
  %411 = vst [vmem:[%s3 + $0x8] sm:$0xff] %v406
  // Predicated region
  $region14: #{basecnn_forward.1} parent=0 // pred_check
    _
  $region15: #{basecnn_forward.1} parent=0 // pred_check_branch
    %413 = sbr.rel (0) target = $region17
  $region16: #{basecnn_forward.1} parent=0 // pred_region
    _
  $region17: #{basecnn_forward.1} parent=0 // pred_fallthru
    _
  // Predicated region
  $region18: #{basecnn_forward.1} parent=0 // pred_check
    _
  $region19: #{basecnn_forward.1} parent=0 // pred_check_branch
    %415 = sbr.rel (0) target = $region21
  $region20: #{basecnn_forward.1} parent=0 // pred_region
    _
  $region21: #{basecnn_forward.1} parent=0 // pred_fallthru
    _

</llo_original>
